<compile_context>
chip_gen: v5e
topology: v5e:2x2
jax: 0.10.0
libtpu: 0.0.40
codegen_flags: <defaults>
</compile_context>

<pallas_src>
import jax
import jax.numpy as jnp
from jax.experimental import pallas as pl
from jax.experimental.pallas import tpu as pltpu


def _round_up(a, b):
    return -(-a // b) * b


def _deconv_kernel(x_ref, w_ref, b_ref, o_ref):
    # x_ref: (1, C_in, T)   NCHW slice, lane dim = flattened (h, w)
    # w_ref: (K, C_in)      K = C_out*s*s, rows ordered (co, kh, kw)
    # b_ref: (K, 1)         f32 bias column
    # o_ref: (1, K, T)      lane-dense output block
    c_in = x_ref.shape[1]
    if c_in <= 16:
        # Tiny contraction dim: VPU broadcast-multiply-accumulate, skip the MXU.
        x = x_ref[0].astype(jnp.float32)            # (C_in, T)
        w = w_ref[...].astype(jnp.float32)          # (K, C_in)
        acc = w[:, 0:1] * x[0:1, :]                 # (K, T) outer product
        for ci in range(1, c_in):                   # static, short unrolled loop
            acc = acc + w[:, ci : ci + 1] * x[ci : ci + 1, :]
    else:
        # Large contraction dim: MXU path, f32 accumulation.
        acc = jnp.dot(w_ref[...], x_ref[0], preferred_element_type=jnp.float32)
    acc = acc + b_ref[...].astype(jnp.float32)      # row-broadcast bias
    o_ref[0] = jnp.maximum(acc, 0.0).astype(o_ref.dtype)   # fused ReLU


def upsampling_deconv_block(x, weight, bias, stride=2, t_hw=None, compute_dtype=None):
    """ConvTranspose2d(kernel=stride, stride=stride, padding=0) + ReLU.

    x:      (N, C_in, H, W)  NCHW
    weight: (C_in, C_out, s, s)  (PyTorch ConvTranspose2d layout)
    bias:   (C_out,)
    compute_dtype: optionally cast x/weight (e.g. jnp.bfloat16) to halve HBM
        traffic on v6e/v7x; accumulation stays f32 either way.
    """
    N, C_in, H, W = x.shape
    _, C_out, s, _ = weight.shape
    assert s == stride
    K = C_out * s * s
    HW = H * W

    if compute_dtype is not None:
        x = x.astype(compute_dtype)
        weight = weight.astype(compute_dtype)
    out_dtype = x.dtype

    in_bytes = jnp.dtype(x.dtype).itemsize
    out_bytes = jnp.dtype(out_dtype).itemsize
    lane = 128

    # --- spatial tile selection: lane-dim tile, multiple of 128, VMEM-budgeted ---
    if t_hw is None:
        # double-buffered x-block + out-block bytes per lane column
        bytes_per_col = 2 * (C_in * in_bytes + K * out_bytes)
        vmem_budget = 8 * 1024 * 1024   # safely inside scoped VMEM on v5e/v6e/v7x
        t_max = max(lane, (vmem_budget // bytes_per_col) // lane * lane)
        t_hw = min(t_max, 2048, _round_up(HW, lane))
        # keep >=2 grid blocks so both v7x TensorCores get work
        if N == 1 and HW > lane and t_hw >= _round_up(HW, lane):
            t_hw = max(lane, _round_up(_round_up(HW, lane) // 2, lane))
    assert t_hw % lane == 0
    HW_pad = _round_up(HW, t_hw)

    # --- glue (no input transpose: NCHW flattens row-major) -------------------
    x_flat = x.reshape(N, C_in, HW)
    if HW_pad != HW:
        x_flat = jnp.pad(x_flat, ((0, 0), (0, 0), (0, HW_pad - HW)))
    # W_t[(co, kh, kw), ci] = weight[ci, co, kh, kw]   (tiny tensor)
    w_t = jnp.transpose(weight, (1, 2, 3, 0)).reshape(K, C_in)
    b_col = jnp.repeat(bias.astype(jnp.float32), s * s).reshape(K, 1)

    grid = (N, HW_pad // t_hw)
    cost = pl.CostEstimate(
        flops=2 * N * HW * C_in * K,
        transcendentals=0,
        bytes_accessed=(N * C_in * HW + K * C_in) * in_bytes
        + K * 4
        + N * K * HW * out_bytes,
    )

    out_slab = pl.pallas_call(
        _deconv_kernel,
        out_shape=jax.ShapeDtypeStruct((N, K, HW_pad), out_dtype),
        grid_spec=pltpu.PrefetchScalarGridSpec(
            num_scalar_prefetch=0,
            grid=grid,
            in_specs=[
                pl.BlockSpec((1, C_in, t_hw), lambda n, j: (n, 0, j)),
                pl.BlockSpec((K, C_in), lambda n, j: (0, 0)),   # constant block
                pl.BlockSpec((K, 1), lambda n, j: (0, 0)),      # constant block
            ],
            out_specs=pl.BlockSpec((1, K, t_hw), lambda n, j: (n, 0, j)),
        ),
        compiler_params=pltpu.CompilerParams(
            dimension_semantics=("parallel", "parallel"),
        ),
        cost_estimate=cost,
    )(x_flat, w_t, b_col)

    # --- glue: single output-only layout pass, (kh,kw) interleave into (H,W) ---
    out_slab = out_slab[:, :, :HW]
    out = out_slab.reshape(N, C_out, s, s, H, W)
    out = jnp.transpose(out, (0, 1, 4, 2, 5, 3)).reshape(N, C_out, H * s, W * s)
    return out


def _reference(x, weight, bias, stride=2):
    # Pure-JAX reference of the non-overlapping ConvTranspose2d + ReLU.
    N, C_in, H, W = x.shape
    _, C_out, s, _ = weight.shape
    y = jnp.einsum("nchw,cokl->nohkwl", x, weight)          # (N, C_out, H, s, W, s)
    y = y.reshape(N, C_out, H * s, W * s) + bias[None, :, None, None]
    return jnp.maximum(y, 0.0)


if __name__ == "__main__":
    key = jax.random.PRNGKey(0)
    k1, k2, k3 = jax.random.split(key, 3)

    N, C_in, H, W = 2, 4, 16, 16
    C_out, stride = 8, 2

    x = jax.random.normal(k1, (N, C_in, H, W), dtype=jnp.float32)
    # ConvTranspose2d weight shape in PyTorch: (in_channels, out_channels, kH, kW)
    weight = jax.random.normal(k2, (C_in, C_out, stride, stride), dtype=jnp.float32) * 0.1
    bias = jax.random.normal(k3, (C_out,), dtype=jnp.float32) * 0.1

    ref = _reference(x, weight, bias, stride=stride)

    # f32 path (bit-tight check); jit so the kernel + output interleave compile
    # into one XLA program (no eager dispatch of the glue ops).
    fwd_f32 = jax.jit(lambda a, w, b: upsampling_deconv_block(a, w, b, stride=stride))
    out = jax.block_until_ready(fwd_f32(x, weight, bias))
    assert out.shape == (N, C_out, H * stride, W * stride)
    assert jnp.allclose(out, ref, atol=1e-5, rtol=1e-5)

    # bf16-I/O path (halved HBM traffic on v6e/v7x), f32 accumulation inside
    fwd_bf16 = jax.jit(
        lambda a, w, b: upsampling_deconv_block(
            a, w, b, stride=stride, compute_dtype=jnp.bfloat16
        )
    )
    out_bf16 = jax.block_until_ready(fwd_bf16(x, weight, bias))
    assert jnp.allclose(out_bf16.astype(jnp.float32), ref, atol=5e-2, rtol=5e-2)

    print("KERNEL_OK")
</pallas_src>

<mosaic_0001>
module attributes {stable_mosaic.version = 11 : i64} {
  func.func @_deconv_kernel(%arg0: i32, %arg1: i32, %arg2: memref<1x4x256xf32, #tpu.memory_space<vmem>>, %arg3: memref<32x4xf32, #tpu.memory_space<vmem>>, %arg4: memref<32x1xf32, #tpu.memory_space<vmem>>, %arg5: memref<1x32x256xf32, #tpu.memory_space<vmem>>) attributes {dimension_semantics = [#tpu.dimension_semantics<parallel>, #tpu.dimension_semantics<parallel>], iteration_bounds = array<i64: 2, 1>, scalar_prefetch = 0 : i64, scratch_operands = 0 : i64, tpu.core_type = #tpu.core_type<tc>, window_params = [{transform_indices = @transform_0, window_bounds = array<i64: 1, 4, 256>}, {pipeline_mode = #tpu.pipeline_mode<synchronous>, transform_indices = @transform_1, window_bounds = array<i64: 32, 4>}, {pipeline_mode = #tpu.pipeline_mode<synchronous>, transform_indices = @transform_2, window_bounds = array<i64: 32, 1>}, {transform_indices = @transform_3, window_bounds = array<i64: 1, 32, 256>}]} {
    %c0 = arith.constant 0 : index
    %c0_0 = arith.constant 0 : index
    %c0_1 = arith.constant 0 : index
    %0 = vector.load %arg2[%c0, %c0_0, %c0_1] : memref<1x4x256xf32, #tpu.memory_space<vmem>>, vector<1x4x256xf32>
    %1 = vector.shape_cast %0 : vector<1x4x256xf32> to vector<4x256xf32>
    %c0_2 = arith.constant 0 : index
    %c0_3 = arith.constant 0 : index
    %2 = vector.load %arg3[%c0_2, %c0_3] : memref<32x4xf32, #tpu.memory_space<vmem>>, vector<32x4xf32>
    %3 = vector.extract_strided_slice %2 {offsets = [0, 0], sizes = [32, 1], strides = [1, 1]} : vector<32x4xf32> to vector<32x1xf32>
    %4 = vector.extract_strided_slice %1 {offsets = [0, 0], sizes = [1, 256], strides = [1, 1]} : vector<4x256xf32> to vector<1x256xf32>
    %5 = vector.broadcast %3 : vector<32x1xf32> to vector<32x256xf32>
    %6 = vector.broadcast %4 : vector<1x256xf32> to vector<32x256xf32>
    %7 = arith.mulf %5, %6 : vector<32x256xf32>
    %8 = vector.extract_strided_slice %2 {offsets = [0, 1], sizes = [32, 1], strides = [1, 1]} : vector<32x4xf32> to vector<32x1xf32>
    %9 = vector.extract_strided_slice %1 {offsets = [1, 0], sizes = [1, 256], strides = [1, 1]} : vector<4x256xf32> to vector<1x256xf32>
    %10 = vector.broadcast %8 : vector<32x1xf32> to vector<32x256xf32>
    %11 = vector.broadcast %9 : vector<1x256xf32> to vector<32x256xf32>
    %12 = arith.mulf %10, %11 : vector<32x256xf32>
    %13 = arith.addf %7, %12 : vector<32x256xf32>
    %14 = vector.extract_strided_slice %2 {offsets = [0, 2], sizes = [32, 1], strides = [1, 1]} : vector<32x4xf32> to vector<32x1xf32>
    %15 = vector.extract_strided_slice %1 {offsets = [2, 0], sizes = [1, 256], strides = [1, 1]} : vector<4x256xf32> to vector<1x256xf32>
    %16 = vector.broadcast %14 : vector<32x1xf32> to vector<32x256xf32>
    %17 = vector.broadcast %15 : vector<1x256xf32> to vector<32x256xf32>
    %18 = arith.mulf %16, %17 : vector<32x256xf32>
    %19 = arith.addf %13, %18 : vector<32x256xf32>
    %20 = vector.extract_strided_slice %2 {offsets = [0, 3], sizes = [32, 1], strides = [1, 1]} : vector<32x4xf32> to vector<32x1xf32>
    %21 = vector.extract_strided_slice %1 {offsets = [3, 0], sizes = [1, 256], strides = [1, 1]} : vector<4x256xf32> to vector<1x256xf32>
    %22 = vector.broadcast %20 : vector<32x1xf32> to vector<32x256xf32>
    %23 = vector.broadcast %21 : vector<1x256xf32> to vector<32x256xf32>
    %24 = arith.mulf %22, %23 : vector<32x256xf32>
    %25 = arith.addf %19, %24 : vector<32x256xf32>
    %c0_4 = arith.constant 0 : index
    %c0_5 = arith.constant 0 : index
    %26 = vector.load %arg4[%c0_4, %c0_5] : memref<32x1xf32, #tpu.memory_space<vmem>>, vector<32x1xf32>
    %27 = vector.broadcast %26 : vector<32x1xf32> to vector<32x256xf32>
    %28 = arith.addf %25, %27 : vector<32x256xf32>
    %cst = arith.constant 0.000000e+00 : f32
    %29 = vector.broadcast %cst : f32 to vector<32x256xf32>
    %30 = arith.maximumf %28, %29 : vector<32x256xf32>
    %c0_6 = arith.constant 0 : index
    %c0_7 = arith.constant 0 : index
    %c0_8 = arith.constant 0 : index
    %31 = vector.load %arg5[%c0_6, %c0_7, %c0_8] : memref<1x32x256xf32, #tpu.memory_space<vmem>>, vector<1x32x256xf32>
    %32 = vector.shape_cast %31 : vector<1x32x256xf32> to vector<32x256xf32>
    %33 = vector.shape_cast %30 : vector<32x256xf32> to vector<1x32x256xf32>
    tpu.vector_store %arg5[%c0_6, %c0_7, %c0_8], %33 {strides = array<i32>} : memref<1x32x256xf32, #tpu.memory_space<vmem>>, vector<1x32x256xf32>,
    return
  }
  func.func @transform_0(%arg0: i32, %arg1: i32) -> (i32, i32, i32) {
    %c0_i32 = arith.constant 0 : i32
    %c0_i32_0 = arith.constant 0 : i32
    return %arg0, %c0_i32, %arg1 : i32, i32, i32
  }
  func.func @transform_1(%arg0: i32, %arg1: i32) -> (i32, i32) {
    %c0_i32 = arith.constant 0 : i32
    %c0_i32_0 = arith.constant 0 : i32
    %c0_i32_1 = arith.constant 0 : i32
    return %c0_i32, %c0_i32_0 : i32, i32
  }
  func.func @transform_2(%arg0: i32, %arg1: i32) -> (i32, i32) {
    %c0_i32 = arith.constant 0 : i32
    %c0_i32_0 = arith.constant 0 : i32
    %c0_i32_1 = arith.constant 0 : i32
    return %c0_i32, %c0_i32_0 : i32, i32
  }
  func.func @transform_3(%arg0: i32, %arg1: i32) -> (i32, i32, i32) {
    %c0_i32 = arith.constant 0 : i32
    %c0_i32_0 = arith.constant 0 : i32
    return %arg0, %c0_i32, %arg1 : i32, i32, i32
  }
}

</mosaic_0001>

<llo_original>
// kernel: _lambda_.1
$region0: #{_lambda_.1}
  #allocation0 [shape = 'u32[]', space=smem, size = 0x4, offset = 0x4, fixed_abs, tag = 'smem constant byte address 0x4 - core index']
  #allocation1 [shape = 'u32[72,128]{1,0:T(1,128)}', space=vmem, size = 0x9000, scoped, tag = 'internal scratch']
  %s0 = inlined_call_operand.vmem [shape: f32[2,4,256], index: 0, kind: input, shape index: {}]
  %s1 = inlined_call_operand.vmem [shape: f32[32,4], index: 1, kind: input, shape index: {}]
  %s2 = inlined_call_operand.vmem [shape: f32[32,1], index: 2, kind: input, shape index: {}]
  %s3 = inlined_call_operand.vmem [shape: f32[2,32,256], index: 3, kind: output, shape index: {}]
  %s4 = sld [smem:[#allocation0]]
  $region45: #{_lambda_.1} parent=0
    _
  %s6 = ssub.s32 1, %s4
  %s7 = scalar_select 0, %s6, %s4
  loop: start=0, step=1, limit=4
  $region2: #{_lambda_.1} parent=0 // loop_pre_header
    _
  $region3: #{_lambda_.1} parent=0 // loop_header
    %s9 = sphi 0, %s13
    %p10 = scmp.ge.s32.totalorder %s9, 4
    %s16 = sphi 0, %s28
    %s17 = sphi 0, %s24
    %s18 = sphi 0, %s16
    %s19 = sphi 0, %s17
    %s20 = sphi 0, %s18
    %s21 = sphi 0, %s19
    %s33 = sphi 0, %s35
    %s36 = sphi 0, %s33
    %s37 = sphi 0, %s36
    %s53 = sphi 0, %s37
    %s57 = sphi 0, %s57
    %s59 = sphi 0, %s57
    %s60 = sphi 0, %s59
    %s74 = sphi 0, %s60
    %s78 = sphi 0, %s78
    %s80 = sphi 0, %s78
    %s81 = sphi 0, %s80
    %s95 = sphi 0, %s81
    %s103 = sphi 0, %s105
    %s106 = sphi 0, %s103
    %s107 = sphi 0, %s106
    %s123 = sphi 0, %s107
  $region4: #{_lambda_.1} parent=0 // loop_header_branch
    %12 = sbr.rel (%p10) target = $region8
  $region5: #{_lambda_.1} parent=0 // loop_body
    %s14 = ssub.s32 %s9, 1
    %s15 = ssub.s32 %s9, 2
    %s22 = sadd.s32 1, %s17
    %p23 = scmp.ge.s32.totalorder %s22, 1
    %s24 = scalar_select %p23, 0, %s22
    %s25 = sadd.s32 1, %s16
    %s26 = scalar_select %p23, %s25, %s16
    %p27 = scmp.ge.s32.totalorder %s26, 2
    %s28 = scalar_select %p27, 0, %s26
    %s29 = ssub.s32 %s16, %s28
    %s30 = ssub.s32 %s17, %s24
    %s31 = sor.u32 %s29, %s30
    %p32 = scmp.eq.s32.totalorder %s31, 0
    %s34 = sadd.s32 %s33, 1
    %s35 = scalar_select %p32, %s33, %s34
    %p38 = pneg %p32
    %p39 = scmp.eq.s32.totalorder %s9, 1
    %p40 = por %p38, %p39
    %p41 = scmp.ne.s32.totalorder %s33, %s36
    %p42 = scmp.eq.s32.totalorder %s9, 0
    %p43 = por %p41, %p42
    %p44 = scmp.ne.s32.totalorder %s33, %s36
    %p45 = scmp.eq.s32.totalorder %s14, 1
    %p46 = por %p44, %p45
    %p47 = scmp.ne.s32.totalorder %s36, %s37
    %p48 = scmp.eq.s32.totalorder %s14, 0
    %p49 = por %p47, %p48
    %p50 = scmp.ne.s32.totalorder %s36, %s37
    %p51 = scmp.eq.s32.totalorder %s15, 1
    %p52 = por %p50, %p51
    %p54 = scmp.ne.s32.totalorder %s37, %s53
    %p55 = scmp.eq.s32.totalorder %s15, 0
    %p56 = por %p54, %p55
    %s58 = sadd.s32 %s57, 1
    %p61 = scmp.eq.s32.totalorder %s9, 1
    %p62 = scmp.ne.s32.totalorder %s57, %s59
    %p63 = scmp.eq.s32.totalorder %s9, 0
    %p64 = por %p62, %p63
    %p65 = scmp.ne.s32.totalorder %s57, %s59
    %p66 = scmp.eq.s32.totalorder %s14, 1
    %p67 = por %p65, %p66
    %p68 = scmp.ne.s32.totalorder %s59, %s60
    %p69 = scmp.eq.s32.totalorder %s14, 0
    %p70 = por %p68, %p69
    %p71 = scmp.ne.s32.totalorder %s59, %s60
    %p72 = scmp.eq.s32.totalorder %s15, 1
    %p73 = por %p71, %p72
    %p75 = scmp.ne.s32.totalorder %s60, %s74
    %p76 = scmp.eq.s32.totalorder %s15, 0
    %p77 = por %p75, %p76
    %s79 = sadd.s32 %s78, 1
    %p82 = scmp.eq.s32.totalorder %s9, 1
    %p83 = scmp.ne.s32.totalorder %s78, %s80
    %p84 = scmp.eq.s32.totalorder %s9, 0
    %p85 = por %p83, %p84
    %p86 = scmp.ne.s32.totalorder %s78, %s80
    %p87 = scmp.eq.s32.totalorder %s14, 1
    %p88 = por %p86, %p87
    %p89 = scmp.ne.s32.totalorder %s80, %s81
    %p90 = scmp.eq.s32.totalorder %s14, 0
    %p91 = por %p89, %p90
    %p92 = scmp.ne.s32.totalorder %s80, %s81
    %p93 = scmp.eq.s32.totalorder %s15, 1
    %p94 = por %p92, %p93
    %p96 = scmp.ne.s32.totalorder %s81, %s95
    %p97 = scmp.eq.s32.totalorder %s15, 0
    %p98 = por %p96, %p97
    %s99 = ssub.s32 %s16, %s28
    %s100 = ssub.s32 %s17, %s24
    %s101 = sor.u32 %s99, %s100
    %p102 = scmp.eq.s32.totalorder %s101, 0
    %s104 = sadd.s32 %s103, 1
    %s105 = scalar_select %p102, %s103, %s104
    %p108 = pneg %p102
    %p109 = scmp.eq.s32.totalorder %s9, 1
    %p110 = por %p108, %p109
    %p111 = scmp.ne.s32.totalorder %s103, %s106
    %p112 = scmp.eq.s32.totalorder %s9, 0
    %p113 = por %p111, %p112
    %p114 = scmp.ne.s32.totalorder %s103, %s106
    %p115 = scmp.eq.s32.totalorder %s14, 1
    %p116 = por %p114, %p115
    %p117 = scmp.ne.s32.totalorder %s106, %s107
    %p118 = scmp.eq.s32.totalorder %s14, 0
    %p119 = por %p117, %p118
    %p120 = scmp.ne.s32.totalorder %s106, %s107
    %p121 = scmp.eq.s32.totalorder %s15, 1
    %p122 = por %p120, %p121
    %p124 = scmp.ne.s32.totalorder %s107, %s123
    %p125 = scmp.eq.s32.totalorder %s15, 0
    %p126 = por %p124, %p125
    %p127 = scmp.le.s32.totalorder 1, %s9
    %p128 = scmp.lt.s32.totalorder %s9, 3
    %p129 = pnand %p127, %p128
    %p130 = pneg %p129
    // Predicated region
    $region9: #{_lambda_.1} parent=5 // pred_check
      _
    $region10: #{_lambda_.1} parent=5 // pred_check_branch
      %132 = sbr.rel (%p129) target = $region12
    $region11: #{_lambda_.1} parent=5 // pred_region
      %s133 = ssub.s32 %s9, 1
      // Predicated region
      $region13: #{_lambda_.1} parent=11 // pred_check
        %p134 = pneg %p70
      $region14: #{_lambda_.1} parent=11 // pred_check_branch
        %136 = sbr.rel (%p134) target = $region16
      $region15: #{_lambda_.1} parent=11 // pred_region
        _
      $region16: #{_lambda_.1} parent=11 // pred_fallthru
        _
      // Predicated region
      $region17: #{_lambda_.1} parent=11 // pred_check
        %p137 = pneg %p91
      $region18: #{_lambda_.1} parent=11 // pred_check_branch
        %139 = sbr.rel (%p137) target = $region20
      $region19: #{_lambda_.1} parent=11 // pred_region
        _
      $region20: #{_lambda_.1} parent=11 // pred_fallthru
        _
    $region12: #{_lambda_.1} parent=5 // pred_fallthru
      _
    %p140 = scmp.lt.s32.totalorder %s9, 2
    // Predicated region
    $region21: #{_lambda_.1} parent=5 // pred_check
      %p141 = pneg %p140
    $region22: #{_lambda_.1} parent=5 // pred_check_branch
      %143 = sbr.rel (%p141) target = $region24
    $region23: #{_lambda_.1} parent=5 // pred_region
      // Predicated region
      $region25: #{_lambda_.1} parent=23 // pred_check
        %p144 = pneg %p43
      $region26: #{_lambda_.1} parent=23 // pred_check_branch
        %146 = sbr.rel (%p144) target = $region28
      $region27: #{_lambda_.1} parent=23 // pred_region
        %s147 = smul.u32 2, %s17
        %p148 = scmp.lt.s32.totalorder %s16, 1
        %s149 = scalar_select %p148, %s16, 1
        %p150 = scmp.lt.s32.totalorder %s147, 1
        %s151 = scalar_select %p150, %s147, 1
        %s152 = smul.addr %s149, 2
        %s153 = sadd.s32 %s151, %s152
        %s154 = smul.addr %s153, 4
        %s155 = scalar_lea.vmem %s0, %s154
        %s156 = smul.u32 2, %s17
      $region28: #{_lambda_.1} parent=23 // pred_fallthru
        _
    $region24: #{_lambda_.1} parent=5 // pred_fallthru
      _
    %p157 = scmp.le.s32.totalorder 1, %s9
    %p158 = scmp.lt.s32.totalorder %s9, 3
    %p159 = pnand %p157, %p158
    %p160 = pneg %p159
    // Predicated region
    $region29: #{_lambda_.1} parent=5 // pred_check
      _
    $region30: #{_lambda_.1} parent=5 // pred_check_branch
      %162 = sbr.rel (%p159) target = $region32
    $region31: #{_lambda_.1} parent=5 // pred_region
      %s163 = ssub.s32 %s9, 1
      %s164 = smul.u32 2, %s19
      %p165 = scmp.lt.s32.totalorder %s18, 1
      %s166 = scalar_select %p165, %s18, 1
      %p167 = scmp.lt.s32.totalorder %s164, 1
      %s168 = scalar_select %p167, %s164, 1
      %s169 = smul.addr %s166, 2
      %s170 = sadd.s32 %s168, %s169
      %s171 = smul.addr %s170, 4
      %s172 = scalar_lea.vmem %s0, %s171
      %p173 = pneg %p49
      %p174 = pneg %p46
      %p175 = pneg %p70
      %p176 = pneg %p67
      %p177 = pneg %p91
      %p178 = pneg %p88
      %p179 = pneg %p119
      %p180 = pneg %p116
      %s181 = smul.u32 2, %s19
      %p182 = scmp.lt.s32.totalorder %s18, 1
      %s183 = scalar_select %p182, %s18, 1
      %p184 = scmp.lt.s32.totalorder %s181, 1
      %s185 = scalar_select %p184, %s181, 1
      %s186 = smul.addr %s183, 8
      %s187 = sadd.s32 %s185, %s186
      %s188 = smul.addr %s187, 8
      %s189 = scalar_lea.vmem %s3, %s188
      %s190 = smul.u32 2, %s19
      %p191 = scmp.lt.s32.totalorder %s18, 1
      %s192 = scalar_select %p191, %s18, 1
      %p193 = scmp.lt.s32.totalorder %s190, 1
      %s194 = scalar_select %p193, %s190, 1
      %s195 = smul.addr %s192, 2
      %s196 = sadd.s32 %s194, %s195
      %s197 = smul.addr %s196, 4
      %s198 = scalar_lea.vmem %s0, %s197
      %s199 = smul.u32 2, %s19
      %s200 = smul.u32 2, %s19
      %p201 = scmp.lt.s32.totalorder %s18, 1
      %s202 = scalar_select %p201, %s18, 1
      %p203 = scmp.lt.s32.totalorder %s200, 1
      %s204 = scalar_select %p203, %s200, 1
      %s205 = smul.addr %s202, 8
      %s206 = sadd.s32 %s204, %s205
      %s207 = smul.addr %s206, 8
      %s208 = scalar_lea.vmem %s3, %s207
      %s209 = smul.u32 2, %s19
      %v210 = vld [vmem:[%s198] sm:$0xff]
      %v211 = vld [vmem:[%s1] sm:$0xff]
      %v212 = vld [vmem:[%s1 + $0x8] sm:$0xff]
      %v213 = vld [vmem:[%s1 + $0x10] sm:$0xff]
      %v214 = vld [vmem:[%s1 + $0x18] sm:$0xff]
      %216 = vset.pattern.permute.xlu0 0
      %217 = vperm.xlu0 %216, %v211
      %v218 = vpop.permute.xlu0 %217
      %221 = vset.pattern.permute.xlu0 0
      %222 = vperm.xlu0 %221, %v212
      %v223 = vpop.permute.xlu0 %222
      %226 = vset.pattern.permute.xlu0 0
      %227 = vperm.xlu0 %226, %v213
      %v228 = vpop.permute.xlu0 %227
      %231 = vset.pattern.permute.xlu0 0
      %232 = vperm.xlu0 %231, %v214
      %v233 = vpop.permute.xlu0 %232
      %v236 = vperm.slane %v210, 0
      %v237 = vperm.slane %v210, 4
      %v240 = vperm.slane %v236, 0
      %v241 = vperm.slane %v237, 0
      %v242 = vmul.f32 %v218, %v240
      %v243 = vmul.f32 %v218, %v241
      %v244 = vmul.f32 %v223, %v240
      %v245 = vmul.f32 %v223, %v241
      %v246 = vmul.f32 %v228, %v240
      %v247 = vmul.f32 %v228, %v241
      %v248 = vmul.f32 %v233, %v240
      %v249 = vmul.f32 %v233, %v241
      %250 = vset.pattern.permute.xlu0 1
      %251 = vperm.xlu0 %250, %v211
      %v252 = vpop.permute.xlu0 %251
      %254 = vset.pattern.permute.xlu0 1
      %255 = vperm.xlu0 %254, %v212
      %v256 = vpop.permute.xlu0 %255
      %258 = vset.pattern.permute.xlu0 1
      %259 = vperm.xlu0 %258, %v213
      %v260 = vpop.permute.xlu0 %259
      %262 = vset.pattern.permute.xlu0 1
      %263 = vperm.xlu0 %262, %v214
      %v264 = vpop.permute.xlu0 %263
      %v266 = vperm.slane %v210, 1
      %v267 = vperm.slane %v210, 5
      %v270 = vperm.slane %v266, 1
      %v271 = vperm.slane %v267, 1
      %v272 = vmul.f32 %v252, %v270
      %v273 = vmul.f32 %v252, %v271
      %v274 = vmul.f32 %v256, %v270
      %v275 = vmul.f32 %v256, %v271
      %v276 = vmul.f32 %v260, %v270
      %v277 = vmul.f32 %v260, %v271
      %v278 = vmul.f32 %v264, %v270
      %v279 = vmul.f32 %v264, %v271
      %v280 = vadd.f32 %v242, %v272
      %v281 = vadd.f32 %v243, %v273
      %v282 = vadd.f32 %v244, %v274
      %v283 = vadd.f32 %v245, %v275
      %v284 = vadd.f32 %v246, %v276
      %v285 = vadd.f32 %v247, %v277
      %v286 = vadd.f32 %v248, %v278
      %v287 = vadd.f32 %v249, %v279
      %288 = vset.pattern.permute.xlu0 2
      %289 = vperm.xlu0 %288, %v211
      %v290 = vpop.permute.xlu0 %289
      %292 = vset.pattern.permute.xlu0 2
      %293 = vperm.xlu0 %292, %v212
      %v294 = vpop.permute.xlu0 %293
      %296 = vset.pattern.permute.xlu0 2
      %297 = vperm.xlu0 %296, %v213
      %v298 = vpop.permute.xlu0 %297
      %300 = vset.pattern.permute.xlu0 2
      %301 = vperm.xlu0 %300, %v214
      %v302 = vpop.permute.xlu0 %301
      %v304 = vperm.slane %v210, 2
      %v305 = vperm.slane %v210, 6
      %v308 = vperm.slane %v304, 2
      %v309 = vperm.slane %v305, 2
      %v310 = vmul.f32 %v290, %v308
      %v311 = vmul.f32 %v290, %v309
      %v312 = vmul.f32 %v294, %v308
      %v313 = vmul.f32 %v294, %v309
      %v314 = vmul.f32 %v298, %v308
      %v315 = vmul.f32 %v298, %v309
      %v316 = vmul.f32 %v302, %v308
      %v317 = vmul.f32 %v302, %v309
      %v318 = vadd.f32 %v280, %v310
      %v319 = vadd.f32 %v281, %v311
      %v320 = vadd.f32 %v282, %v312
      %v321 = vadd.f32 %v283, %v313
      %v322 = vadd.f32 %v284, %v314
      %v323 = vadd.f32 %v285, %v315
      %v324 = vadd.f32 %v286, %v316
      %v325 = vadd.f32 %v287, %v317
      %326 = vset.pattern.permute.xlu0 3
      %327 = vperm.xlu0 %326, %v211
      %v328 = vpop.permute.xlu0 %327
      %330 = vset.pattern.permute.xlu0 3
      %331 = vperm.xlu0 %330, %v212
      %v332 = vpop.permute.xlu0 %331
      %334 = vset.pattern.permute.xlu0 3
      %335 = vperm.xlu0 %334, %v213
      %v336 = vpop.permute.xlu0 %335
      %338 = vset.pattern.permute.xlu0 3
      %339 = vperm.xlu0 %338, %v214
      %v340 = vpop.permute.xlu0 %339
      %v342 = vperm.slane %v210, 3
      %v343 = vperm.slane %v210, 7
      %v346 = vperm.slane %v342, 3
      %v347 = vperm.slane %v343, 3
      %v348 = vmul.f32 %v328, %v346
      %v349 = vmul.f32 %v328, %v347
      %v350 = vmul.f32 %v332, %v346
      %v351 = vmul.f32 %v332, %v347
      %v352 = vmul.f32 %v336, %v346
      %v353 = vmul.f32 %v336, %v347
      %v354 = vmul.f32 %v340, %v346
      %v355 = vmul.f32 %v340, %v347
      %v356 = vadd.f32 %v318, %v348
      %v357 = vadd.f32 %v319, %v349
      %v358 = vadd.f32 %v320, %v350
      %v359 = vadd.f32 %v321, %v351
      %v360 = vadd.f32 %v322, %v352
      %v361 = vadd.f32 %v323, %v353
      %v362 = vadd.f32 %v324, %v354
      %v363 = vadd.f32 %v325, %v355
      %v364 = vld [vmem:[%s2] sm:$0xff]
      %v365 = vld [vmem:[%s2 + $0x8] sm:$0xff]
      %v366 = vld [vmem:[%s2 + $0x10] sm:$0xff]
      %v367 = vld [vmem:[%s2 + $0x18] sm:$0xff]
      %369 = vset.pattern.permute.xlu0 0
      %370 = vperm.xlu0 %369, %v364
      %v371 = vpop.permute.xlu0 %370
      %374 = vset.pattern.permute.xlu0 0
      %375 = vperm.xlu0 %374, %v365
      %v376 = vpop.permute.xlu0 %375
      %379 = vset.pattern.permute.xlu0 0
      %380 = vperm.xlu0 %379, %v366
      %v381 = vpop.permute.xlu0 %380
      %384 = vset.pattern.permute.xlu0 0
      %385 = vperm.xlu0 %384, %v367
      %v386 = vpop.permute.xlu0 %385
      %v388 = vadd.f32 %v356, %v371
      %v389 = vadd.f32 %v357, %v371
      %v390 = vadd.f32 %v358, %v376
      %v391 = vadd.f32 %v359, %v376
      %v392 = vadd.f32 %v360, %v381
      %v393 = vadd.f32 %v361, %v381
      %v394 = vadd.f32 %v362, %v386
      %v395 = vadd.f32 %v363, %v386
      %v396 = vmax.f32 %v388, 0.0
      %v397 = vmax.f32 %v389, 0.0
      %v398 = vmax.f32 %v390, 0.0
      %v399 = vmax.f32 %v391, 0.0
      %v400 = vmax.f32 %v392, 0.0
      %v401 = vmax.f32 %v393, 0.0
      %v402 = vmax.f32 %v394, 0.0
      %v403 = vmax.f32 %v395, 0.0
      %404 = vst [vmem:[%s208] sm:$0xff] %v396
      %405 = vst [vmem:[%s208 + $0x8] sm:$0xff] %v397
      %406 = vst [vmem:[%s208 + $0x10] sm:$0xff] %v398
      %407 = vst [vmem:[%s208 + $0x18] sm:$0xff] %v399
      %408 = vst [vmem:[%s208 + $0x20] sm:$0xff] %v400
      %409 = vst [vmem:[%s208 + $0x28] sm:$0xff] %v401
      %410 = vst [vmem:[%s208 + $0x30] sm:$0xff] %v402
      %411 = vst [vmem:[%s208 + $0x38] sm:$0xff] %v403
      %s412 = smul.u32 2, %s19
      %p413 = scmp.lt.s32.totalorder %s18, 1
      %s414 = scalar_select %p413, %s18, 1
      %p415 = scmp.lt.s32.totalorder %s412, 1
      %s416 = scalar_select %p415, %s412, 1
      %s417 = smul.addr %s414, 8
      %s418 = sadd.s32 %s416, %s417
      %s419 = smul.addr %s418, 8
      %s420 = scalar_lea.vmem %s3, %s419
      // Predicated region
      $region33: #{_lambda_.1} parent=31 // pred_check
        %p421 = pneg %p116
      $region34: #{_lambda_.1} parent=31 // pred_check_branch
        %423 = sbr.rel (%p421) target = $region36
      $region35: #{_lambda_.1} parent=31 // pred_region
        %s424 = smul.u32 2, %s19
      $region36: #{_lambda_.1} parent=31 // pred_fallthru
        _
    $region32: #{_lambda_.1} parent=5 // pred_fallthru
      _
    %p425 = scmp.le.s32.totalorder 2, %s9
    // Predicated region
    $region37: #{_lambda_.1} parent=5 // pred_check
      %p426 = pneg %p425
    $region38: #{_lambda_.1} parent=5 // pred_check_branch
      %428 = sbr.rel (%p426) target = $region40
    $region39: #{_lambda_.1} parent=5 // pred_region
      %s429 = ssub.s32 %s9, 2
      // Predicated region
      $region41: #{_lambda_.1} parent=39 // pred_check
        %p430 = pneg %p122
      $region42: #{_lambda_.1} parent=39 // pred_check_branch
        %432 = sbr.rel (%p430) target = $region44
      $region43: #{_lambda_.1} parent=39 // pred_region
        %s433 = smul.u32 2, %s21
        %p434 = scmp.lt.s32.totalorder %s20, 1
        %s435 = scalar_select %p434, %s20, 1
        %p436 = scmp.lt.s32.totalorder %s433, 1
        %s437 = scalar_select %p436, %s433, 1
        %s438 = smul.addr %s435, 8
        %s439 = sadd.s32 %s437, %s438
        %s440 = smul.addr %s439, 8
        %s441 = scalar_lea.vmem %s3, %s440
      $region44: #{_lambda_.1} parent=39 // pred_fallthru
        _
    $region40: #{_lambda_.1} parent=5 // pred_fallthru
      _
  $region6: #{_lambda_.1} parent=0 // loop_footer
    %s13 = sadd.s32 1, %s9
  $region7: #{_lambda_.1} parent=0 // loop_footer_branch
    %8 = sbr.rel target = $region3
  $region8: #{_lambda_.1} parent=0 // loop_exit
    _

</llo_original>
